<compile_context>
chip_gen: v7x
topology: tpu7x:2x2x1
jax: 0.10.0
libtpu: 0.0.40
codegen_flags: <defaults>
</compile_context>

<pallas_src>
import functools

import jax
import jax.numpy as jnp
from jax.experimental import pallas as pl
from jax.experimental.pallas import tpu as pltpu

_MiB = 1024 * 1024
# Stay comfortably inside v7x's 64 MiB/TC (v5e/v6e have 128 MiB, also fine).
_VMEM_CAP = 48 * _MiB
# Working-set budget used to choose between fused / weight-stationary / tiled.
_VMEM_BUDGET = 40 * _MiB


# ---------------------------------------------------------------------------
# Activations (mirrors get_activation in the PyTorch module)
# ---------------------------------------------------------------------------
def _apply_activation(y, name):
    if name == 'ReLU':
        return jnp.maximum(y, 0.0)
    elif name == 'Tanh':
        return jnp.tanh(y)
    elif name == 'Identity':
        return y
    elif name == 'Sigmoid':
        return jax.nn.sigmoid(y)
    elif name == 'LeakyReLU':
        # The reference module constructs nn.LeakyReLU(0.2).
        return jnp.where(y >= 0, y, 0.2 * y)
    else:
        raise AssertionError('Not Implemented')


# ---------------------------------------------------------------------------
# Tiling helpers
# ---------------------------------------------------------------------------
def _vmem_limit(need_bytes):
    return int(min(_VMEM_CAP, max(32 * _MiB, 2 * need_bytes)))


def _pick_m_tile(M, cap=256):
    """Row tile: full extent for small M, else 256 with a cdiv grid.

    A ragged M edge is safe here: padded rows of the input block only affect
    their own (masked-out) output rows."""
    return M if M <= cap else cap


def _pick_lane_tile(N, candidates=(512, 256, 128)):
    """Lane-dense column tile (multiple of 128, or full extent)."""
    for c in candidates:
        if c <= N and N % c == 0:
            return c
    if N <= candidates[0]:
        return N
    return 256  # ragged N edge: garbage cols only reach masked-out outputs


def _pick_k_tile(K, candidates=(1024, 512, 256)):
    """Reduction tile: must divide K exactly (a ragged K edge would corrupt
    the reduction), else collapse to the full extent."""
    for c in candidates:
        if c < K and K % c == 0:
            return c
    return K


# ---------------------------------------------------------------------------
# Kernels
# ---------------------------------------------------------------------------
def _fused_mlp_kernel(*refs, activations, compute_dtype):
    """Whole MLP in one kernel: refs = (x, w0, b0, w1, b1, ..., out)."""
    n_layers = len(activations)
    x_ref = refs[0]
    o_ref = refs[1 + 2 * n_layers]

    h = x_ref[...]
    for li in range(n_layers):
        w_ref = refs[1 + 2 * li]
        b_ref = refs[2 + 2 * li]
        w = w_ref[...]
        if compute_dtype is not None:
            h = h.astype(compute_dtype)
            w = w.astype(compute_dtype)
        y = jnp.dot(h, w, preferred_element_type=jnp.float32)
        y = y + b_ref[...].astype(jnp.float32)
        h = _apply_activation(y, activations[li])
    o_ref[...] = h.astype(o_ref.dtype)


def _linear_act_kernel(x_ref, w_ref, b_ref, o_ref, *, activation, compute_dtype):
    """Fused y = act(x @ w + b); the full K extent is in one block, so there is
    no reduction loop, no accumulator scratch and no pl.when gating."""
    x = x_ref[...]
    w = w_ref[...]
    if compute_dtype is not None:
        x = x.astype(compute_dtype)
        w = w.astype(compute_dtype)
    y = jnp.dot(x, w, preferred_element_type=jnp.float32)
    y = y + b_ref[...].astype(jnp.float32)
    o_ref[...] = _apply_activation(y, activation).astype(o_ref.dtype)


def _linear_act_ktiled_kernel(x_ref, w_ref, b_ref, o_ref, acc_ref, *,
                              activation, compute_dtype):
    """Tiled K reduction with an f32 VMEM accumulator (large-layer fallback)."""
    k = pl.program_id(2)

    @pl.when(k == 0)
    def _():
        acc_ref[...] = jnp.zeros_like(acc_ref)

    x = x_ref[...]
    w = w_ref[...]
    if compute_dtype is not None:
        x = x.astype(compute_dtype)
        w = w.astype(compute_dtype)
    acc_ref[...] += jnp.dot(x, w, preferred_element_type=jnp.float32)

    @pl.when(k == pl.num_programs(2) - 1)
    def _():
        y = acc_ref[...] + b_ref[...].astype(jnp.float32)
        o_ref[...] = _apply_activation(y, activation).astype(o_ref.dtype)


# ---------------------------------------------------------------------------
# Per-layer fused Linear + bias + activation
# ---------------------------------------------------------------------------
def linear_act(x, w, b, activation, *, compute_dtype=None, out_dtype=None):
    """y = activation(x @ w + b) as a single fused Pallas kernel.

    x: (M, K), w: (K, N), b: (N,)
    """
    M, K = x.shape
    K2, N = w.shape
    assert K == K2, (K, K2)
    out_dtype = out_dtype or x.dtype
    b2d = b.reshape(1, N)

    x_bytes = jnp.dtype(x.dtype).itemsize
    w_bytes = jnp.dtype(w.dtype).itemsize

    tm = _pick_m_tile(M)
    m_blocks = pl.cdiv(M, tm)

    kern = functools.partial(_linear_act_kernel, activation=activation,
                             compute_dtype=compute_dtype)

    # ---- Mode 1: whole weight resident in VMEM, grid over M only. ----------
    # Weight HBM traffic = exactly one read; K reduction collapsed.
    ws_need = (2 * tm * K * x_bytes + 2 * K * N * w_bytes
               + 2 * tm * N * x_bytes + tm * N * 4)
    if ws_need <= _VMEM_BUDGET:
        return pl.pallas_call(
            kern,
            out_shape=jax.ShapeDtypeStruct((M, N), out_dtype),
            grid_spec=pltpu.PrefetchScalarGridSpec(
                num_scalar_prefetch=0,
                grid=(m_blocks,),
                in_specs=[
                    pl.BlockSpec((tm, K), lambda i: (i, 0)),
                    pl.BlockSpec((K, N), lambda i: (0, 0)),   # weight-stationary
                    pl.BlockSpec((1, N), lambda i: (0, 0)),   # bias DMA'd once
                ],
                out_specs=pl.BlockSpec((tm, N), lambda i: (i, 0)),
            ),
            compiler_params=pltpu.CompilerParams(
                dimension_semantics=("parallel",),
                vmem_limit_bytes=_vmem_limit(ws_need),
            ),
        )(x, w, b2d)

    tn = _pick_lane_tile(N)
    tk = _pick_k_tile(K)
    n_blocks = pl.cdiv(N, tn)

    # ---- Mode 2: K collapsed (no reduction grid axis), N tiled. -------------
    nok_need = (2 * tm * K * x_bytes + 2 * K * tn * w_bytes
                + 2 * tm * tn * x_bytes + tm * tn * 4)
    if tk == K or nok_need <= _VMEM_BUDGET:
        # TODO(synk): a huge K with no clean 256/512/1024 divisor lands here
        # with a large working set; pad K to a tileable size if that ever bites.
        return pl.pallas_call(
            kern,
            out_shape=jax.ShapeDtypeStruct((M, N), out_dtype),
            grid_spec=pltpu.PrefetchScalarGridSpec(
                num_scalar_prefetch=0,
                grid=(m_blocks, n_blocks),
                in_specs=[
                    pl.BlockSpec((tm, K), lambda i, j: (i, 0)),
                    pl.BlockSpec((K, tn), lambda i, j: (0, j)),
                    pl.BlockSpec((1, tn), lambda i, j: (0, j)),
                ],
                out_specs=pl.BlockSpec((tm, tn), lambda i, j: (i, j)),
            ),
            compiler_params=pltpu.CompilerParams(
                dimension_semantics=("parallel", "parallel"),
                vmem_limit_bytes=_vmem_limit(nok_need),
            ),
        )(x, w, b2d)

    # ---- Mode 3: fully tiled (tm, tn, tk) with f32 accumulator. -------------
    tiled_need = (2 * tm * tk * x_bytes + 2 * tk * tn * w_bytes
                  + 2 * tm * tn * x_bytes + tm * tn * 4)
    return pl.pallas_call(
        functools.partial(_linear_act_ktiled_kernel, activation=activation,
                          compute_dtype=compute_dtype),
        out_shape=jax.ShapeDtypeStruct((M, N), out_dtype),
        grid_spec=pltpu.PrefetchScalarGridSpec(
            num_scalar_prefetch=0,
            grid=(m_blocks, n_blocks, K // tk),
            in_specs=[
                pl.BlockSpec((tm, tk), lambda i, j, k: (i, k)),
                pl.BlockSpec((tk, tn), lambda i, j, k: (k, j)),
                pl.BlockSpec((1, tn), lambda i, j, k: (0, j)),
            ],
            out_specs=pl.BlockSpec((tm, tn), lambda i, j, k: (i, j)),
            scratch_shapes=[pltpu.VMEM((tm, tn), jnp.float32)],
        ),
        compiler_params=pltpu.CompilerParams(
            dimension_semantics=("parallel", "parallel", "arbitrary"),
            vmem_limit_bytes=_vmem_limit(tiled_need),
        ),
    )(x, w, b2d)


# ---------------------------------------------------------------------------
# Whole-MLP fused forward
# ---------------------------------------------------------------------------
def _fused_vmem_bytes(tm, dims, params, x_bytes):
    # Weights/biases double-buffered by the pipeline (conservative; index_map
    # is constant), x / out blocks, plus f32 intermediates.
    w_b = sum(2 * w.size * jnp.dtype(w.dtype).itemsize for w, _ in params)
    b_b = sum(2 * 8 * b.shape[0] * 4 for _, b in params)  # (1,N) sublane-padded
    io = 2 * tm * dims[0] * x_bytes + 2 * tm * dims[-1] * x_bytes
    inter = sum(2 * tm * d * 4 for d in dims[1:])
    return w_b + b_b + io + inter


def _mlp_fused(x, params, activations, *, tm, need, compute_dtype):
    M, K0 = x.shape
    n_out = params[-1][0].shape[1]
    m_blocks = pl.cdiv(M, tm)

    in_specs = [pl.BlockSpec((tm, K0), lambda i: (i, 0))]
    args = [x]
    for (w, b) in params:
        k_in, n_l = w.shape
        in_specs.append(pl.BlockSpec((k_in, n_l), lambda i: (0, 0)))  # stationary
        in_specs.append(pl.BlockSpec((1, n_l), lambda i: (0, 0)))
        args += [w, b.reshape(1, n_l)]

    return pl.pallas_call(
        functools.partial(_fused_mlp_kernel, activations=tuple(activations),
                          compute_dtype=compute_dtype),
        out_shape=jax.ShapeDtypeStruct((M, n_out), x.dtype),
        grid_spec=pltpu.PrefetchScalarGridSpec(
            num_scalar_prefetch=0,
            grid=(m_blocks,),
            in_specs=in_specs,
            out_specs=pl.BlockSpec((tm, n_out), lambda i: (i, 0)),
        ),
        compiler_params=pltpu.CompilerParams(
            dimension_semantics=("parallel",),
            vmem_limit_bytes=_vmem_limit(need),
        ),
    )(*args)


def mlp_forward(x, params, activations, *, compute_dtype=None):
    """Equivalent of MLP.forward for the default config (bias=True,
    use_bn=False, drop_prob=None).

    compute_dtype=jnp.bfloat16 casts the MXU operands (f32 accumulation and
    epilogue retained) for the v6e/v7x bf16 MXU peak."""
    # TODO(synk): BatchNorm1d (use_bn=True) and Dropout (drop_prob) branches of
    # the PyTorch module are not implemented in the Pallas path.
    assert len(params) == len(activations)
    M, K0 = x.shape
    dims = [K0] + [w.shape[1] for w, _ in params]
    x_bytes = jnp.dtype(x.dtype).itemsize

    tm = _pick_m_tile(M)
    need = _fused_vmem_bytes(tm, dims, params, x_bytes)
    if need <= _VMEM_BUDGET:
        # Whole MLP in one kernel launch, weights resident in VMEM.
        return _mlp_fused(x, params, activations, tm=tm, need=need,
                          compute_dtype=compute_dtype)

    # Layers too large for whole-MLP residency: per-layer fused kernels.
    for (w, b), act in zip(params, activations):
        x = linear_act(x, w, b, act, compute_dtype=compute_dtype)
    return x


def mlp_forward_ref(x, params, activations):
    """Pure-JAX reference for correctness checking."""
    for (w, b), act in zip(params, activations):
        x = _apply_activation(jnp.dot(x, w) + b, act)
    return x


# ---------------------------------------------------------------------------
# Parameter init (PyTorch-Linear-style uniform; weights stored as (in, out))
# ---------------------------------------------------------------------------
def init_mlp_params(key, layer_sizes, dtype=jnp.float32):
    params = []
    for i in range(len(layer_sizes) - 1):
        key, kw, kb = jax.random.split(key, 3)
        fan_in = layer_sizes[i]
        bound = 1.0 / (fan_in ** 0.5)
        w = jax.random.uniform(kw, (layer_sizes[i], layer_sizes[i + 1]),
                               dtype, -bound, bound)
        b = jax.random.uniform(kb, (layer_sizes[i + 1],), dtype, -bound, bound)
        params.append((w, b))
    return params


if __name__ == "__main__":
    key = jax.random.PRNGKey(0)
    key, kx = jax.random.split(key)

    # Small shapes consistent with MLP usage: x is (batch, features).
    batch = 8
    layer_sizes = [256, 512, 128]
    activations = ['ReLU', 'Tanh']

    params = init_mlp_params(key, layer_sizes, dtype=jnp.float32)
    x = jax.random.normal(kx, (batch, layer_sizes[0]), dtype=jnp.float32)

    # --- main path: whole-MLP fused into one pallas_call (f32) ---
    y = mlp_forward(x, params, activations)
    jax.block_until_ready(y)
    y_ref = mlp_forward_ref(x, params, activations)
    assert y.shape == (batch, layer_sizes[-1]) and y.dtype == x.dtype
    assert jnp.allclose(y, y_ref, atol=1e-3, rtol=1e-3), (
        float(jnp.max(jnp.abs(y - y_ref))))

    # --- per-layer fallback path (weight-stationary, K collapsed), LeakyReLU ---
    w0, b0 = params[0]
    y1 = linear_act(x, w0, b0, 'LeakyReLU')
    jax.block_until_ready(y1)
    y1_ref = _apply_activation(jnp.dot(x, w0) + b0, 'LeakyReLU')
    assert jnp.allclose(y1, y1_ref, atol=1e-3, rtol=1e-3), (
        float(jnp.max(jnp.abs(y1 - y1_ref))))

    # --- bf16 MXU operands with f32 accumulation (v6e/v7x fast path) ---
    y_bf16 = mlp_forward(x, params, activations, compute_dtype=jnp.bfloat16)
    jax.block_until_ready(y_bf16)
    assert jnp.allclose(y_bf16, y_ref, atol=5e-2, rtol=5e-2), (
        float(jnp.max(jnp.abs(y_bf16 - y_ref))))

    print("KERNEL_OK")
</pallas_src>

<mosaic_0001>
module attributes {stable_mosaic.version = 11 : i64} {
  func.func @_fused_mlp_kernel(%arg0: i32, %arg1: memref<8x256xf32, #tpu.memory_space<vmem>>, %arg2: memref<256x512xf32, #tpu.memory_space<vmem>>, %arg3: memref<1x512xf32, #tpu.memory_space<vmem>>, %arg4: memref<512x128xf32, #tpu.memory_space<vmem>>, %arg5: memref<1x128xf32, #tpu.memory_space<vmem>>, %arg6: memref<8x128xf32, #tpu.memory_space<vmem>>) attributes {dimension_semantics = [#tpu.dimension_semantics<parallel>], iteration_bounds = array<i64: 1>, scalar_prefetch = 0 : i64, scratch_operands = 0 : i64, tpu.core_type = #tpu.core_type<tc>, window_params = [{transform_indices = @transform_0, window_bounds = array<i64: 8, 256>}, {pipeline_mode = #tpu.pipeline_mode<synchronous>, transform_indices = @transform_1, window_bounds = array<i64: 256, 512>}, {pipeline_mode = #tpu.pipeline_mode<synchronous>, transform_indices = @transform_2, window_bounds = array<i64: 1, 512>}, {pipeline_mode = #tpu.pipeline_mode<synchronous>, transform_indices = @transform_3, window_bounds = array<i64: 512, 128>}, {pipeline_mode = #tpu.pipeline_mode<synchronous>, transform_indices = @transform_4, window_bounds = array<i64: 1, 128>}, {transform_indices = @transform_5, window_bounds = array<i64: 8, 128>}]} {
    %c0 = arith.constant 0 : index
    %c0_0 = arith.constant 0 : index
    %0 = vector.load %arg1[%c0, %c0_0] : memref<8x256xf32, #tpu.memory_space<vmem>>, vector<8x256xf32>
    %c0_1 = arith.constant 0 : index
    %c0_2 = arith.constant 0 : index
    %1 = vector.load %arg2[%c0_1, %c0_2] : memref<256x512xf32, #tpu.memory_space<vmem>>, vector<256x512xf32>
    %cst = arith.constant dense<0.000000e+00> : vector<8x512xf32>
    %2 = tpu.matmul %0, %1, %cst {dimension_numbers = #tpu.dot_dimension_numbers<[1], [0], [0], [1], [0, 0, 1, 1], [], []>} : vector<8x256xf32>, vector<256x512xf32>, vector<8x512xf32> -> vector<8x512xf32>
    %c0_3 = arith.constant 0 : index
    %c0_4 = arith.constant 0 : index
    %3 = vector.load %arg3[%c0_3, %c0_4] : memref<1x512xf32, #tpu.memory_space<vmem>>, vector<1x512xf32>
    %4 = vector.broadcast %3 : vector<1x512xf32> to vector<8x512xf32>
    %5 = arith.addf %2, %4 : vector<8x512xf32>
    %cst_5 = arith.constant 0.000000e+00 : f32
    %6 = vector.broadcast %cst_5 : f32 to vector<8x512xf32>
    %7 = arith.maximumf %5, %6 : vector<8x512xf32>
    %c0_6 = arith.constant 0 : index
    %c0_7 = arith.constant 0 : index
    %8 = vector.load %arg4[%c0_6, %c0_7] : memref<512x128xf32, #tpu.memory_space<vmem>>, vector<512x128xf32>
    %cst_8 = arith.constant dense<0.000000e+00> : vector<8x128xf32>
    %9 = tpu.matmul %7, %8, %cst_8 {dimension_numbers = #tpu.dot_dimension_numbers<[1], [0], [0], [1], [0, 0, 1, 1], [], []>} : vector<8x512xf32>, vector<512x128xf32>, vector<8x128xf32> -> vector<8x128xf32>
    %c0_9 = arith.constant 0 : index
    %c0_10 = arith.constant 0 : index
    %10 = vector.load %arg5[%c0_9, %c0_10] : memref<1x128xf32, #tpu.memory_space<vmem>>, vector<1x128xf32>
    %11 = vector.broadcast %10 : vector<1x128xf32> to vector<8x128xf32>
    %12 = arith.addf %9, %11 : vector<8x128xf32>
    %13 = math.tanh %12 : vector<8x128xf32>
    %c0_11 = arith.constant 0 : index
    %c0_12 = arith.constant 0 : index
    %14 = vector.load %arg6[%c0_11, %c0_12] : memref<8x128xf32, #tpu.memory_space<vmem>>, vector<8x128xf32>
    tpu.vector_store %arg6[%c0_11, %c0_12], %13 {strides = array<i32>} : memref<8x128xf32, #tpu.memory_space<vmem>>, vector<8x128xf32>,
    return
  }
  func.func @transform_0(%arg0: i32) -> (i32, i32) {
    %c0_i32 = arith.constant 0 : i32
    %c0_i32_0 = arith.constant 0 : i32
    return %arg0, %c0_i32 : i32, i32
  }
  func.func @transform_1(%arg0: i32) -> (i32, i32) {
    %c0_i32 = arith.constant 0 : i32
    %c0_i32_0 = arith.constant 0 : i32
    %c0_i32_1 = arith.constant 0 : i32
    return %c0_i32, %c0_i32_0 : i32, i32
  }
  func.func @transform_2(%arg0: i32) -> (i32, i32) {
    %c0_i32 = arith.constant 0 : i32
    %c0_i32_0 = arith.constant 0 : i32
    %c0_i32_1 = arith.constant 0 : i32
    return %c0_i32, %c0_i32_0 : i32, i32
  }
  func.func @transform_3(%arg0: i32) -> (i32, i32) {
    %c0_i32 = arith.constant 0 : i32
    %c0_i32_0 = arith.constant 0 : i32
    %c0_i32_1 = arith.constant 0 : i32
    return %c0_i32, %c0_i32_0 : i32, i32
  }
  func.func @transform_4(%arg0: i32) -> (i32, i32) {
    %c0_i32 = arith.constant 0 : i32
    %c0_i32_0 = arith.constant 0 : i32
    %c0_i32_1 = arith.constant 0 : i32
    return %c0_i32, %c0_i32_0 : i32, i32
  }
  func.func @transform_5(%arg0: i32) -> (i32, i32) {
    %c0_i32 = arith.constant 0 : i32
    %c0_i32_0 = arith.constant 0 : i32
    return %arg0, %c0_i32 : i32, i32
  }
}

</mosaic_0001>

<llo_original>
// kernel: tpu_custom_call.1
$region0: #{tpu_custom_call.1}
  #allocation0 [shape = 'u32[]', space=smem, size = 0x4, offset = 0x4, fixed_abs, tag = 'smem constant byte address 0x4 - core index']
  #allocation1 [shape = 'u32[144,128]{1,0:T(1,128)}', space=vmem, size = 0x12000, scoped, tag = 'internal scratch']
  %s0 = inlined_call_operand.hbm [shape: f32[8,256], index: 0, kind: input, shape index: {}]
  %s1 = inlined_call_operand.hbm [shape: f32[256,512], index: 1, kind: input, shape index: {}]
  %s2 = inlined_call_operand.vmem [shape: f32[1,512], index: 2, kind: input, shape index: {}]
  %s3 = inlined_call_operand.hbm [shape: f32[512,128], index: 3, kind: input, shape index: {}]
  %s4 = inlined_call_operand.vmem [shape: f32[1,128], index: 4, kind: input, shape index: {}]
  %s5 = inlined_call_operand.hbm [shape: f32[8,128], index: 5, kind: output, shape index: {}]
  %s6 = sld [smem:[#allocation0]]
  $region42: #{tpu_custom_call.1} parent=0
    _
  %s8 = ssub.s32 1, %s6
  %s9 = scalar_select 0, %s8, %s6
  $region1: #{tpu_custom_call.1} parent=0
    #allocation2 [shape = 'u8[8192]{0}', space=vmem, size = 0x2000, scoped, tag = 'input window, operand 0, single buffered']
    #allocation3 [shape = 's32[1]{0}', space=sflag, size = 0x4, scoped, tag = 'scoped memory for tpu_custom_call.1']
    #allocation4 [shape = 's32[1]{0}', space=sflag, size = 0x4, scoped, tag = 'scoped memory for tpu_custom_call.1']
    #allocation5 [shape = 'u8[524288]{0}', space=vmem, size = 0x80000, scoped, tag = 'input window, operand 1, single buffered']
    #allocation6 [shape = 's32[1]{0}', space=sflag, size = 0x4, scoped, tag = 'scoped memory for tpu_custom_call.1']
    #allocation7 [shape = 'u8[262144]{0}', space=vmem, size = 0x40000, scoped, tag = 'input window, operand 3, single buffered']
    #allocation8 [shape = 'u8[4096]{0}', space=vmem, size = 0x1000, scoped, tag = 'output window, operand 0, single buffered']
    %10 = vsyncpa [#allocation3], 0
    %11 = vsyncpa [#allocation6], 0
    %12 = vsyncpa [#allocation4], 0
    // Predicated region
    $region2: #{tpu_custom_call.1} parent=1 // pred_check
      _
    $region3: #{tpu_custom_call.1} parent=1 // pred_check_branch
      %14 = sbr.rel (0) target = $region5
    $region4: #{tpu_custom_call.1} parent=1 // pred_region
      %s16 = ssub.s32 256, 256
      %17 = vsyncadd [#allocation3], %s16
      %s19 = sshll.u32 [#allocation2], 4
      %s20 = int_to_ptr.vmem [resolvable:$true] %s19
      %22 = dma.hbm_to_vmem [thread:$0]  %s0, 256, %s20, [#allocation3]
    $region5: #{tpu_custom_call.1} parent=1 // pred_fallthru
      _
    // Predicated region
    $region6: #{tpu_custom_call.1} parent=1 // pred_check
      _
    $region7: #{tpu_custom_call.1} parent=1 // pred_check_branch
      %24 = sbr.rel (0) target = $region9
    $region8: #{tpu_custom_call.1} parent=1 // pred_region
      %s26 = ssub.s32 16384, 16384
      %27 = vsyncadd [#allocation6], %s26
      %s28 = sshll.u32 [#allocation5], 4
      %s29 = int_to_ptr.vmem [resolvable:$true] %s28
      %34 = dma.hbm_to_vmem [thread:$0]  %s1, 16384, %s29, [#allocation6], 512, 512, 32
    $region9: #{tpu_custom_call.1} parent=1 // pred_fallthru
      _
    // Predicated region
    $region10: #{tpu_custom_call.1} parent=1 // pred_check
      _
    $region11: #{tpu_custom_call.1} parent=1 // pred_check_branch
      %36 = sbr.rel (0) target = $region13
    $region12: #{tpu_custom_call.1} parent=1 // pred_region
      _
    $region13: #{tpu_custom_call.1} parent=1 // pred_fallthru
      _
    // Predicated region
    $region14: #{tpu_custom_call.1} parent=1 // pred_check
      _
    $region15: #{tpu_custom_call.1} parent=1 // pred_check_branch
      %38 = sbr.rel (0) target = $region17
    $region16: #{tpu_custom_call.1} parent=1 // pred_region
      %s40 = ssub.s32 8192, 8192
      %41 = vsyncadd [#allocation6], %s40
      %s42 = sshll.u32 [#allocation7], 4
      %s43 = int_to_ptr.vmem [resolvable:$true] %s42
      %48 = dma.hbm_to_vmem [thread:$0]  %s3, 8192, %s43, [#allocation6], 128, 128, 8
    $region17: #{tpu_custom_call.1} parent=1 // pred_fallthru
      _
    // Predicated region
    $region18: #{tpu_custom_call.1} parent=1 // pred_check
      _
    $region19: #{tpu_custom_call.1} parent=1 // pred_check_branch
      %50 = sbr.rel (0) target = $region21
    $region20: #{tpu_custom_call.1} parent=1 // pred_region
      _
    $region21: #{tpu_custom_call.1} parent=1 // pred_fallthru
      _
    // Predicated region
    $region22: #{tpu_custom_call.1} parent=1 // pred_check
      _
    $region23: #{tpu_custom_call.1} parent=1 // pred_check_branch
      %52 = sbr.rel (0) target = $region25
    $region24: #{tpu_custom_call.1} parent=1 // pred_region
      %53 = dma.done [#allocation3], 256
    $region25: #{tpu_custom_call.1} parent=1 // pred_fallthru
      _
    // Predicated region
    $region26: #{tpu_custom_call.1} parent=1 // pred_check
      _
    $region27: #{tpu_custom_call.1} parent=1 // pred_check_branch
      %55 = sbr.rel (0) target = $region29
    $region28: #{tpu_custom_call.1} parent=1 // pred_region
      %56 = dma.done [#allocation6], 16384
    $region29: #{tpu_custom_call.1} parent=1 // pred_fallthru
      _
    // Predicated region
    $region30: #{tpu_custom_call.1} parent=1 // pred_check
      _
    $region31: #{tpu_custom_call.1} parent=1 // pred_check_branch
      %58 = sbr.rel (0) target = $region33
    $region32: #{tpu_custom_call.1} parent=1 // pred_region
      %59 = dma.done [#allocation6], 8192
    $region33: #{tpu_custom_call.1} parent=1 // pred_fallthru
      _
    %v60 = vld [vmem:[#allocation2] sm:$0xff]
    %v61 = vld [vmem:[#allocation2 + $0x8] sm:$0xff]
    %v62 = vld [vmem:[#allocation5] sm:$0xff]
    %v63 = vld [vmem:[#allocation5 + $0x8] sm:$0xff]
    %v64 = vld [vmem:[#allocation5 + $0x10] sm:$0xff]
    %v65 = vld [vmem:[#allocation5 + $0x18] sm:$0xff]
    %v66 = vld [vmem:[#allocation5 + $0x20] sm:$0xff]
    %v67 = vld [vmem:[#allocation5 + $0x28] sm:$0xff]
    %v68 = vld [vmem:[#allocation5 + $0x30] sm:$0xff]
    %v69 = vld [vmem:[#allocation5 + $0x38] sm:$0xff]
    %v70 = vld [vmem:[#allocation5 + $0x40] sm:$0xff]
    %v71 = vld [vmem:[#allocation5 + $0x48] sm:$0xff]
    %v72 = vld [vmem:[#allocation5 + $0x50] sm:$0xff]
    %v73 = vld [vmem:[#allocation5 + $0x58] sm:$0xff]
    %v74 = vld [vmem:[#allocation5 + $0x60] sm:$0xff]
    %v75 = vld [vmem:[#allocation5 + $0x68] sm:$0xff]
    %v76 = vld [vmem:[#allocation5 + $0x70] sm:$0xff]
    %v77 = vld [vmem:[#allocation5 + $0x78] sm:$0xff]
    %v78 = vld [vmem:[#allocation5 + $0x80] sm:$0xff]
    %v79 = vld [vmem:[#allocation5 + $0x88] sm:$0xff]
    %v80 = vld [vmem:[#allocation5 + $0x90] sm:$0xff]
    %v81 = vld [vmem:[#allocation5 + $0x98] sm:$0xff]
    %v82 = vld [vmem:[#allocation5 + $0xa0] sm:$0xff]
    %v83 = vld [vmem:[#allocation5 + $0xa8] sm:$0xff]
    %v84 = vld [vmem:[#allocation5 + $0xb0] sm:$0xff]
    %v85 = vld [vmem:[#allocation5 + $0xb8] sm:$0xff]
    %v86 = vld [vmem:[#allocation5 + $0xc0] sm:$0xff]
    %v87 = vld [vmem:[#allocation5 + $0xc8] sm:$0xff]
    %v88 = vld [vmem:[#allocation5 + $0xd0] sm:$0xff]
    %v89 = vld [vmem:[#allocation5 + $0xd8] sm:$0xff]
    %v90 = vld [vmem:[#allocation5 + $0xe0] sm:$0xff]
    %v91 = vld [vmem:[#allocation5 + $0xe8] sm:$0xff]
    %v92 = vld [vmem:[#allocation5 + $0xf0] sm:$0xff]
    %v93 = vld [vmem:[#allocation5 + $0xf8] sm:$0xff]
    %v94 = vld [vmem:[#allocation5 + $0x100] sm:$0xff]
    %v95 = vld [vmem:[#allocation5 + $0x108] sm:$0xff]
    %v96 = vld [vmem:[#allocation5 + $0x110] sm:$0xff]
    %v97 = vld [vmem:[#allocation5 + $0x118] sm:$0xff]
    %v98 = vld [vmem:[#allocation5 + $0x120] sm:$0xff]
    %v99 = vld [vmem:[#allocation5 + $0x128] sm:$0xff]
    %v100 = vld [vmem:[#allocation5 + $0x130] sm:$0xff]
    %v101 = vld [vmem:[#allocation5 + $0x138] sm:$0xff]
    %v102 = vld [vmem:[#allocation5 + $0x140] sm:$0xff]
    %v103 = vld [vmem:[#allocation5 + $0x148] sm:$0xff]
    %v104 = vld [vmem:[#allocation5 + $0x150] sm:$0xff]
    %v105 = vld [vmem:[#allocation5 + $0x158] sm:$0xff]
    %v106 = vld [vmem:[#allocation5 + $0x160] sm:$0xff]
    %v107 = vld [vmem:[#allocation5 + $0x168] sm:$0xff]
    %v108 = vld [vmem:[#allocation5 + $0x170] sm:$0xff]
    %v109 = vld [vmem:[#allocation5 + $0x178] sm:$0xff]
    %v110 = vld [vmem:[#allocation5 + $0x180] sm:$0xff]
    %v111 = vld [vmem:[#allocation5 + $0x188] sm:$0xff]
    %v112 = vld [vmem:[#allocation5 + $0x190] sm:$0xff]
    %v113 = vld [vmem:[#allocation5 + $0x198] sm:$0xff]
    %v114 = vld [vmem:[#allocation5 + $0x1a0] sm:$0xff]
    %v115 = vld [vmem:[#allocation5 + $0x1a8] sm:$0xff]
    %v116 = vld [vmem:[#allocation5 + $0x1b0] sm:$0xff]
    %v117 = vld [vmem:[#allocation5 + $0x1b8] sm:$0xff]
    %v118 = vld [vmem:[#allocation5 + $0x1c0] sm:$0xff]
    %v119 = vld [vmem:[#allocation5 + $0x1c8] sm:$0xff]
    %v120 = vld [vmem:[#allocation5 + $0x1d0] sm:$0xff]
    %v121 = vld [vmem:[#allocation5 + $0x1d8] sm:$0xff]
    %v122 = vld [vmem:[#allocation5 + $0x1e0] sm:$0xff]
    %v123 = vld [vmem:[#allocation5 + $0x1e8] sm:$0xff]
    %v124 = vld [vmem:[#allocation5 + $0x1f0] sm:$0xff]
    %v125 = vld [vmem:[#allocation5 + $0x1f8] sm:$0xff]
    %v126 = vld [vmem:[#allocation5 + $0x200] sm:$0xff]
    %v127 = vld [vmem:[#allocation5 + $0x208] sm:$0xff]
    %v128 = vld [vmem:[#allocation5 + $0x210] sm:$0xff]
    %v129 = vld [vmem:[#allocation5 + $0x218] sm:$0xff]
    %v130 = vld [vmem:[#allocation5 + $0x220] sm:$0xff]
    %v131 = vld [vmem:[#allocation5 + $0x228] sm:$0xff]
    %v132 = vld [vmem:[#allocation5 + $0x230] sm:$0xff]
    %v133 = vld [vmem:[#allocation5 + $0x238] sm:$0xff]
    %v134 = vld [vmem:[#allocation5 + $0x240] sm:$0xff]
    %v135 = vld [vmem:[#allocation5 + $0x248] sm:$0xff]
    %v136 = vld [vmem:[#allocation5 + $0x250] sm:$0xff]
    %v137 = vld [vmem:[#allocation5 + $0x258] sm:$0xff]
    %v138 = vld [vmem:[#allocation5 + $0x260] sm:$0xff]
    %v139 = vld [vmem:[#allocation5 + $0x268] sm:$0xff]
    %v140 = vld [vmem:[#allocation5 + $0x270] sm:$0xff]
    %v141 = vld [vmem:[#allocation5 + $0x278] sm:$0xff]
    %v142 = vld [vmem:[#allocation5 + $0x280] sm:$0xff]
    %v143 = vld [vmem:[#allocation5 + $0x288] sm:$0xff]
    %v144 = vld [vmem:[#allocation5 + $0x290] sm:$0xff]
    %v145 = vld [vmem:[#allocation5 + $0x298] sm:$0xff]
    %v146 = vld [vmem:[#allocation5 + $0x2a0] sm:$0xff]
    %v147 = vld [vmem:[#allocation5 + $0x2a8] sm:$0xff]
    %v148 = vld [vmem:[#allocation5 + $0x2b0] sm:$0xff]
    %v149 = vld [vmem:[#allocation5 + $0x2b8] sm:$0xff]
    %v150 = vld [vmem:[#allocation5 + $0x2c0] sm:$0xff]
    %v151 = vld [vmem:[#allocation5 + $0x2c8] sm:$0xff]
    %v152 = vld [vmem:[#allocation5 + $0x2d0] sm:$0xff]
    %v153 = vld [vmem:[#allocation5 + $0x2d8] sm:$0xff]
    %v154 = vld [vmem:[#allocation5 + $0x2e0] sm:$0xff]
    %v155 = vld [vmem:[#allocation5 + $0x2e8] sm:$0xff]
    %v156 = vld [vmem:[#allocation5 + $0x2f0] sm:$0xff]
    %v157 = vld [vmem:[#allocation5 + $0x2f8] sm:$0xff]
    %v158 = vld [vmem:[#allocation5 + $0x300] sm:$0xff]
    %v159 = vld [vmem:[#allocation5 + $0x308] sm:$0xff]
    %v160 = vld [vmem:[#allocation5 + $0x310] sm:$0xff]
    %v161 = vld [vmem:[#allocation5 + $0x318] sm:$0xff]
    %v162 = vld [vmem:[#allocation5 + $0x320] sm:$0xff]
    %v163 = vld [vmem:[#allocation5 + $0x328] sm:$0xff]
    %v164 = vld [vmem:[#allocation5 + $0x330] sm:$0xff]
    %v165 = vld [vmem:[#allocation5 + $0x338] sm:$0xff]
    %v166 = vld [vmem:[#allocation5 + $0x340] sm:$0xff]
    %v167 = vld [vmem:[#allocation5 + $0x348] sm:$0xff]
    %v168 = vld [vmem:[#allocation5 + $0x350] sm:$0xff]
    %v169 = vld [vmem:[#allocation5 + $0x358] sm:$0xff]
    %v170 = vld [vmem:[#allocation5 + $0x360] sm:$0xff]
    %v171 = vld [vmem:[#allocation5 + $0x368] sm:$0xff]
    %v172 = vld [vmem:[#allocation5 + $0x370] sm:$0xff]
    %v173 = vld [vmem:[#allocation5 + $0x378] sm:$0xff]
    %v174 = vld [vmem:[#allocation5 + $0x380] sm:$0xff]
    %v175 = vld [vmem:[#allocation5 + $0x388] sm:$0xff]
    %v176 = vld [vmem:[#allocation5 + $0x390] sm:$0xff]
    %v177 = vld [vmem:[#allocation5 + $0x398] sm:$0xff]
    %v178 = vld [vmem:[#allocation5 + $0x3a0] sm:$0xff]
    %v179 = vld [vmem:[#allocation5 + $0x3a8] sm:$0xff]
    %v180 = vld [vmem:[#allocation5 + $0x3b0] sm:$0xff]
    %v181 = vld [vmem:[#allocation5 + $0x3b8] sm:$0xff]
    %v182 = vld [vmem:[#allocation5 + $0x3c0] sm:$0xff]
    %v183 = vld [vmem:[#allocation5 + $0x3c8] sm:$0xff]
    %v184 = vld [vmem:[#allocation5 + $0x3d0] sm:$0xff]
    %v185 = vld [vmem:[#allocation5 + $0x3d8] sm:$0xff]
    %v186 = vld [vmem:[#allocation5 + $0x3e0] sm:$0xff]
    %v187 = vld [vmem:[#allocation5 + $0x3e8] sm:$0xff]
    %v188 = vld [vmem:[#allocation5 + $0x3f0] sm:$0xff]
    %v189 = vld [vmem:[#allocation5 + $0x3f8] sm:$0xff]
    %v190 = vld [vmem:[%s2] sm:$0xf]
    %v192 = vlaneseq
    %v193 = vshrl.u32 %v192, 7
    %v194 = vsub.s32 0, %v193
    %v195 = vrot.slane %v190, %v194
    %v196 = vlaneseq
    %v197 = vshrl.u32 %v196, 7
    %v198 = vsub.s32 1, %v197
    %v199 = vrot.slane %v190, %v198
    %v200 = vlaneseq
    %v201 = vshrl.u32 %v200, 7
    %v202 = vsub.s32 2, %v201
    %v203 = vrot.slane %v190, %v202
    %v204 = vlaneseq
    %v205 = vshrl.u32 %v204, 7
    %v206 = vsub.s32 3, %v205
    %v207 = vrot.slane %v190, %v206
    %212 = vmatprep.subr.mxu0 %v63
    %213 = vmatpush1.msra.mxu0 %v62
    %214 = vmatprep.subr.mxu0 %v67
    %215 = vmatpush1.msra.mxu0 %v66
    %216 = vmatprep.subr.mxu0 %v71
    %217 = vmatpush1.msra.mxu0 %v70
    %218 = vmatprep.subr.mxu0 %v75
    %219 = vmatpush1.msra.mxu0 %v74
    %220 = vmatprep.subr.mxu0 %v79
    %221 = vmatpush1.msra.mxu0 %v78
    %222 = vmatprep.subr.mxu0 %v83
    %223 = vmatpush1.msra.mxu0 %v82
    %224 = vmatprep.subr.mxu0 %v87
    %225 = vmatpush1.msra.mxu0 %v86
    %226 = vmatprep.subr.mxu0 %v91
    %227 = vmatpush1.msra.mxu0 %v90
    %228 = vmatprep.subr.mxu0 %v95
    %229 = vmatpush1.msra.mxu0 %v94
    %230 = vmatprep.subr.mxu0 %v99
    %231 = vmatpush1.msra.mxu0 %v98
    %232 = vmatprep.subr.mxu0 %v103
    %233 = vmatpush1.msra.mxu0 %v102
    %234 = vmatprep.subr.mxu0 %v107
    %235 = vmatpush1.msra.mxu0 %v106
    %236 = vmatprep.subr.mxu0 %v111
    %237 = vmatpush1.msra.mxu0 %v110
    %238 = vmatprep.subr.mxu0 %v115
    %239 = vmatpush1.msra.mxu0 %v114
    %240 = vmatprep.subr.mxu0 %v119
    %241 = vmatpush1.msra.mxu0 %v118
    %242 = vmatprep.subr.mxu0 %v123
    %243 = vmatpush1.msra.mxu0 %v122
    %244 = vmatprep.subr.mxu0 %v127
    %245 = vmatpush1.msra.mxu0 %v126
    %246 = vmatprep.subr.mxu0 %v131
    %247 = vmatpush1.msra.mxu0 %v130
    %248 = vmatprep.subr.mxu0 %v135
    %249 = vmatpush1.msra.mxu0 %v134
    %250 = vmatprep.subr.mxu0 %v139
    %251 = vmatpush1.msra.mxu0 %v138
    %252 = vmatprep.subr.mxu0 %v143
    %253 = vmatpush1.msra.mxu0 %v142
    %254 = vmatprep.subr.mxu0 %v147
    %255 = vmatpush1.msra.mxu0 %v146
    %256 = vmatprep.subr.mxu0 %v151
    %257 = vmatpush1.msra.mxu0 %v150
    %258 = vmatprep.subr.mxu0 %v155
    %259 = vmatpush1.msra.mxu0 %v154
    %260 = vmatprep.subr.mxu0 %v159
    %261 = vmatpush1.msra.mxu0 %v158
    %262 = vmatprep.subr.mxu0 %v163
    %263 = vmatpush1.msra.mxu0 %v162
    %264 = vmatprep.subr.mxu0 %v167
    %265 = vmatpush1.msra.mxu0 %v166
    %266 = vmatprep.subr.mxu0 %v171
    %267 = vmatpush1.msra.mxu0 %v170
    %268 = vmatprep.subr.mxu0 %v175
    %269 = vmatpush1.msra.mxu0 %v174
    %270 = vmatprep.subr.mxu0 %v179
    %271 = vmatpush1.msra.mxu0 %v178
    %272 = vmatprep.subr.mxu0 %v183
    %273 = vmatpush1.msra.mxu0 %v182
    %274 = vmatprep.subr.mxu0 %v187
    %275 = vmatpush1.msra.mxu0 %v186
    %276 = vmatprep.mubr.f32.mxu0 %v61
    %277 = vmatmul.mubr.f32.gmra.mrb[0].mxu0 %v60
    %v278 = vpop.f32.mrb[0].mxu0
    %v279 = vadd.f32 %v195, %v278
    %v280 = vpop.f32.mrb[0].mxu0
    %v281 = vadd.f32 %v199, %v280
    %282 = vdwg.mxu0
    %283 = vmatprep.subr.mxu0 %v65
    %284 = vmatpush1.msra.mxu0 %v64
    %285 = vmatprep.subr.mxu0 %v69
    %286 = vmatpush1.msra.mxu0 %v68
    %287 = vmatprep.subr.mxu0 %v73
    %288 = vmatpush1.msra.mxu0 %v72
    %289 = vmatprep.subr.mxu0 %v77
    %290 = vmatpush1.msra.mxu0 %v76
    %291 = vmatprep.subr.mxu0 %v81
    %292 = vmatpush1.msra.mxu0 %v80
    %293 = vmatprep.subr.mxu0 %v85
    %294 = vmatpush1.msra.mxu0 %v84
    %295 = vmatprep.subr.mxu0 %v89
    %296 = vmatpush1.msra.mxu0 %v88
    %297 = vmatprep.subr.mxu0 %v93
    %298 = vmatpush1.msra.mxu0 %v92
    %299 = vmatprep.subr.mxu0 %v97
    %300 = vmatpush1.msra.mxu0 %v96
    %301 = vmatprep.subr.mxu0 %v101
    %302 = vmatpush1.msra.mxu0 %v100
    %303 = vmatprep.subr.mxu0 %v105
    %304 = vmatpush1.msra.mxu0 %v104
    %305 = vmatprep.subr.mxu0 %v109
    %306 = vmatpush1.msra.mxu0 %v108
    %307 = vmatprep.subr.mxu0 %v113
    %308 = vmatpush1.msra.mxu0 %v112
    %309 = vmatprep.subr.mxu0 %v117
    %310 = vmatpush1.msra.mxu0 %v116
    %311 = vmatprep.subr.mxu0 %v121
    %312 = vmatpush1.msra.mxu0 %v120
    %313 = vmatprep.subr.mxu0 %v125
    %314 = vmatpush1.msra.mxu0 %v124
    %315 = vmatprep.subr.mxu0 %v129
    %316 = vmatpush1.msra.mxu0 %v128
    %317 = vmatprep.subr.mxu0 %v133
    %318 = vmatpush1.msra.mxu0 %v132
    %319 = vmatprep.subr.mxu0 %v137
    %320 = vmatpush1.msra.mxu0 %v136
    %321 = vmatprep.subr.mxu0 %v141
    %322 = vmatpush1.msra.mxu0 %v140
    %323 = vmatprep.subr.mxu0 %v145
    %324 = vmatpush1.msra.mxu0 %v144
    %325 = vmatprep.subr.mxu0 %v149
    %326 = vmatpush1.msra.mxu0 %v148
    %327 = vmatprep.subr.mxu0 %v153
    %328 = vmatpush1.msra.mxu0 %v152
    %329 = vmatprep.subr.mxu0 %v157
    %330 = vmatpush1.msra.mxu0 %v156
    %331 = vmatprep.subr.mxu0 %v161
    %332 = vmatpush1.msra.mxu0 %v160
    %333 = vmatprep.subr.mxu0 %v165
    %334 = vmatpush1.msra.mxu0 %v164
    %335 = vmatprep.subr.mxu0 %v169
    %336 = vmatpush1.msra.mxu0 %v168
    %337 = vmatprep.subr.mxu0 %v173
    %338 = vmatpush1.msra.mxu0 %v172
    %339 = vmatprep.subr.mxu0 %v177
    %340 = vmatpush1.msra.mxu0 %v176
    %341 = vmatprep.subr.mxu0 %v181
    %342 = vmatpush1.msra.mxu0 %v180
    %343 = vmatprep.subr.mxu0 %v185
    %344 = vmatpush1.msra.mxu0 %v184
    %345 = vmatprep.subr.mxu0 %v189
    %346 = vmatpush1.msra.mxu0 %v188
    %347 = vmatprep.mubr.f32.mxu0 %v61
    %348 = vmatmul.mubr.f32.gmra.mrb[0].mxu0 %v60
    %v349 = vpop.f32.mrb[0].mxu0
    %v350 = vadd.f32 %v203, %v349
    %v351 = vpop.f32.mrb[0].mxu0
    %v352 = vadd.f32 %v207, %v351
    %353 = vdwg.mxu0
    %v354 = vmax.f32 %v279, 0.0
    %v355 = vmax.f32 %v281, 0.0
    %v356 = vmax.f32 %v350, 0.0
    %v357 = vmax.f32 %v352, 0.0
    %v358 = vld [vmem:[#allocation7] sm:$0xff]
    %v359 = vld [vmem:[#allocation7 + $0x8] sm:$0xff]
    %v360 = vld [vmem:[#allocation7 + $0x10] sm:$0xff]
    %v361 = vld [vmem:[#allocation7 + $0x18] sm:$0xff]
    %v362 = vld [vmem:[#allocation7 + $0x20] sm:$0xff]
    %v363 = vld [vmem:[#allocation7 + $0x28] sm:$0xff]
    %v364 = vld [vmem:[#allocation7 + $0x30] sm:$0xff]
    %v365 = vld [vmem:[#allocation7 + $0x38] sm:$0xff]
    %v366 = vld [vmem:[#allocation7 + $0x40] sm:$0xff]
    %v367 = vld [vmem:[#allocation7 + $0x48] sm:$0xff]
    %v368 = vld [vmem:[#allocation7 + $0x50] sm:$0xff]
    %v369 = vld [vmem:[#allocation7 + $0x58] sm:$0xff]
    %v370 = vld [vmem:[#allocation7 + $0x60] sm:$0xff]
    %v371 = vld [vmem:[#allocation7 + $0x68] sm:$0xff]
    %v372 = vld [vmem:[#allocation7 + $0x70] sm:$0xff]
    %v373 = vld [vmem:[#allocation7 + $0x78] sm:$0xff]
    %v374 = vld [vmem:[#allocation7 + $0x80] sm:$0xff]
    %v375 = vld [vmem:[#allocation7 + $0x88] sm:$0xff]
    %v376 = vld [vmem:[#allocation7 + $0x90] sm:$0xff]
    %v377 = vld [vmem:[#allocation7 + $0x98] sm:$0xff]
    %v378 = vld [vmem:[#allocation7 + $0xa0] sm:$0xff]
    %v379 = vld [vmem:[#allocation7 + $0xa8] sm:$0xff]
    %v380 = vld [vmem:[#allocation7 + $0xb0] sm:$0xff]
    %v381 = vld [vmem:[#allocation7 + $0xb8] sm:$0xff]
    %v382 = vld [vmem:[#allocation7 + $0xc0] sm:$0xff]
    %v383 = vld [vmem:[#allocation7 + $0xc8] sm:$0xff]
    %v384 = vld [vmem:[#allocation7 + $0xd0] sm:$0xff]
    %v385 = vld [vmem:[#allocation7 + $0xd8] sm:$0xff]
    %v386 = vld [vmem:[#allocation7 + $0xe0] sm:$0xff]
    %v387 = vld [vmem:[#allocation7 + $0xe8] sm:$0xff]
    %v388 = vld [vmem:[#allocation7 + $0xf0] sm:$0xff]
    %v389 = vld [vmem:[#allocation7 + $0xf8] sm:$0xff]
    %v390 = vld [vmem:[#allocation7 + $0x100] sm:$0xff]
    %v391 = vld [vmem:[#allocation7 + $0x108] sm:$0xff]
    %v392 = vld [vmem:[#allocation7 + $0x110] sm:$0xff]
    %v393 = vld [vmem:[#allocation7 + $0x118] sm:$0xff]
    %v394 = vld [vmem:[#allocation7 + $0x120] sm:$0xff]
    %v395 = vld [vmem:[#allocation7 + $0x128] sm:$0xff]
    %v396 = vld [vmem:[#allocation7 + $0x130] sm:$0xff]
    %v397 = vld [vmem:[#allocation7 + $0x138] sm:$0xff]
    %v398 = vld [vmem:[#allocation7 + $0x140] sm:$0xff]
    %v399 = vld [vmem:[#allocation7 + $0x148] sm:$0xff]
    %v400 = vld [vmem:[#allocation7 + $0x150] sm:$0xff]
    %v401 = vld [vmem:[#allocation7 + $0x158] sm:$0xff]
    %v402 = vld [vmem:[#allocation7 + $0x160] sm:$0xff]
    %v403 = vld [vmem:[#allocation7 + $0x168] sm:$0xff]
    %v404 = vld [vmem:[#allocation7 + $0x170] sm:$0xff]
    %v405 = vld [vmem:[#allocation7 + $0x178] sm:$0xff]
    %v406 = vld [vmem:[#allocation7 + $0x180] sm:$0xff]
    %v407 = vld [vmem:[#allocation7 + $0x188] sm:$0xff]
    %v408 = vld [vmem:[#allocation7 + $0x190] sm:$0xff]
    %v409 = vld [vmem:[#allocation7 + $0x198] sm:$0xff]
    %v410 = vld [vmem:[#allocation7 + $0x1a0] sm:$0xff]
    %v411 = vld [vmem:[#allocation7 + $0x1a8] sm:$0xff]
    %v412 = vld [vmem:[#allocation7 + $0x1b0] sm:$0xff]
    %v413 = vld [vmem:[#allocation7 + $0x1b8] sm:$0xff]
    %v414 = vld [vmem:[#allocation7 + $0x1c0] sm:$0xff]
    %v415 = vld [vmem:[#allocation7 + $0x1c8] sm:$0xff]
    %v416 = vld [vmem:[#allocation7 + $0x1d0] sm:$0xff]
    %v417 = vld [vmem:[#allocation7 + $0x1d8] sm:$0xff]
    %v418 = vld [vmem:[#allocation7 + $0x1e0] sm:$0xff]
    %v419 = vld [vmem:[#allocation7 + $0x1e8] sm:$0xff]
    %v420 = vld [vmem:[#allocation7 + $0x1f0] sm:$0xff]
    %v421 = vld [vmem:[#allocation7 + $0x1f8] sm:$0xff]
    %v422 = vld [vmem:[%s4] sm:$0x1]
    %v424 = vlaneseq
    %v425 = vshrl.u32 %v424, 7
    %v426 = vsub.s32 0, %v425
    %v427 = vrot.slane %v422, %v426
    %429 = vmatprep.subr.mxu0 0.0
    %430 = vmatpush1.msra.mxu0 %v358
    %431 = vmatprep.subr.mxu0 0.0
    %432 = vmatpush1.msra.mxu0 %v359
    %433 = vmatprep.subr.mxu0 0.0
    %434 = vmatpush1.msra.mxu0 %v360
    %435 = vmatprep.subr.mxu0 0.0
    %436 = vmatpush1.msra.mxu0 %v361
    %437 = vmatprep.subr.mxu0 0.0
    %438 = vmatpush1.msra.mxu0 %v362
    %439 = vmatprep.subr.mxu0 0.0
    %440 = vmatpush1.msra.mxu0 %v363
    %441 = vmatprep.subr.mxu0 0.0
    %442 = vmatpush1.msra.mxu0 %v364
    %443 = vmatprep.subr.mxu0 0.0
    %444 = vmatpush1.msra.mxu0 %v365
    %445 = vmatprep.subr.mxu0 0.0
    %446 = vmatpush1.msra.mxu0 %v366
    %447 = vmatprep.subr.mxu0 0.0
    %448 = vmatpush1.msra.mxu0 %v367
    %449 = vmatprep.subr.mxu0 0.0
    %450 = vmatpush1.msra.mxu0 %v368
    %451 = vmatprep.subr.mxu0 0.0
    %452 = vmatpush1.msra.mxu0 %v369
    %453 = vmatprep.subr.mxu0 0.0
    %454 = vmatpush1.msra.mxu0 %v370
    %455 = vmatprep.subr.mxu0 0.0
    %456 = vmatpush1.msra.mxu0 %v371
    %457 = vmatprep.subr.mxu0 0.0
    %458 = vmatpush1.msra.mxu0 %v372
    %459 = vmatprep.subr.mxu0 0.0
    %460 = vmatpush1.msra.mxu0 %v373
    %461 = vmatprep.subr.mxu0 0.0
    %462 = vmatpush1.msra.mxu0 %v374
    %463 = vmatprep.subr.mxu0 0.0
    %464 = vmatpush1.msra.mxu0 %v375
    %465 = vmatprep.subr.mxu0 0.0
    %466 = vmatpush1.msra.mxu0 %v376
    %467 = vmatprep.subr.mxu0 0.0
    %468 = vmatpush1.msra.mxu0 %v377
    %469 = vmatprep.subr.mxu0 0.0
    %470 = vmatpush1.msra.mxu0 %v378
    %471 = vmatprep.subr.mxu0 0.0
    %472 = vmatpush1.msra.mxu0 %v379
    %473 = vmatprep.subr.mxu0 0.0
    %474 = vmatpush1.msra.mxu0 %v380
    %475 = vmatprep.subr.mxu0 0.0
    %476 = vmatpush1.msra.mxu0 %v381
    %477 = vmatprep.subr.mxu0 0.0
    %478 = vmatpush1.msra.mxu0 %v382
    %479 = vmatprep.subr.mxu0 0.0
    %480 = vmatpush1.msra.mxu0 %v383
    %481 = vmatprep.subr.mxu0 0.0
    %482 = vmatpush1.msra.mxu0 %v384
    %483 = vmatprep.subr.mxu0 0.0
    %484 = vmatpush1.msra.mxu0 %v385
    %485 = vmatprep.subr.mxu0 0.0
    %486 = vmatpush1.msra.mxu0 %v386
    %487 = vmatprep.subr.mxu0 0.0
    %488 = vmatpush1.msra.mxu0 %v387
    %489 = vmatprep.subr.mxu0 0.0
    %490 = vmatpush1.msra.mxu0 %v388
    %491 = vmatprep.subr.mxu0 0.0
    %492 = vmatpush1.msra.mxu0 %v389
    %493 = vmatprep.mubr.f32.mxu0 %v355
    %494 = vmatmul.mubr.f32.gmra.mrb[0].mxu0 %v354
    %v495 = vpop.f32.mrb[0].mxu0
    %v496 = vadd.f32 %v427, %v495
    %v497 = vpop.f32.mrb[0].mxu0
    %498 = vdwg.mxu0
    %499 = vmatprep.subr.mxu0 0.0
    %500 = vmatpush1.msra.mxu0 %v390
    %501 = vmatprep.subr.mxu0 0.0
    %502 = vmatpush1.msra.mxu0 %v391
    %503 = vmatprep.subr.mxu0 0.0
    %504 = vmatpush1.msra.mxu0 %v392
    %505 = vmatprep.subr.mxu0 0.0
    %506 = vmatpush1.msra.mxu0 %v393
    %507 = vmatprep.subr.mxu0 0.0
    %508 = vmatpush1.msra.mxu0 %v394
    %509 = vmatprep.subr.mxu0 0.0
    %510 = vmatpush1.msra.mxu0 %v395
    %511 = vmatprep.subr.mxu0 0.0
    %512 = vmatpush1.msra.mxu0 %v396
    %513 = vmatprep.subr.mxu0 0.0
    %514 = vmatpush1.msra.mxu0 %v397
    %515 = vmatprep.subr.mxu0 0.0
    %516 = vmatpush1.msra.mxu0 %v398
    %517 = vmatprep.subr.mxu0 0.0
    %518 = vmatpush1.msra.mxu0 %v399
    %519 = vmatprep.subr.mxu0 0.0
    %520 = vmatpush1.msra.mxu0 %v400
    %521 = vmatprep.subr.mxu0 0.0
    %522 = vmatpush1.msra.mxu0 %v401
    %523 = vmatprep.subr.mxu0 0.0
    %524 = vmatpush1.msra.mxu0 %v402
    %525 = vmatprep.subr.mxu0 0.0
    %526 = vmatpush1.msra.mxu0 %v403
    %527 = vmatprep.subr.mxu0 0.0
    %528 = vmatpush1.msra.mxu0 %v404
    %529 = vmatprep.subr.mxu0 0.0
    %530 = vmatpush1.msra.mxu0 %v405
    %531 = vmatprep.subr.mxu0 0.0
    %532 = vmatpush1.msra.mxu0 %v406
    %533 = vmatprep.subr.mxu0 0.0
    %534 = vmatpush1.msra.mxu0 %v407
    %535 = vmatprep.subr.mxu0 0.0
    %536 = vmatpush1.msra.mxu0 %v408
    %537 = vmatprep.subr.mxu0 0.0
    %538 = vmatpush1.msra.mxu0 %v409
    %539 = vmatprep.subr.mxu0 0.0
    %540 = vmatpush1.msra.mxu0 %v410
    %541 = vmatprep.subr.mxu0 0.0
    %542 = vmatpush1.msra.mxu0 %v411
    %543 = vmatprep.subr.mxu0 0.0
    %544 = vmatpush1.msra.mxu0 %v412
    %545 = vmatprep.subr.mxu0 0.0
    %546 = vmatpush1.msra.mxu0 %v413
    %547 = vmatprep.subr.mxu0 0.0
    %548 = vmatpush1.msra.mxu0 %v414
    %549 = vmatprep.subr.mxu0 0.0
    %550 = vmatpush1.msra.mxu0 %v415
    %551 = vmatprep.subr.mxu0 0.0
    %552 = vmatpush1.msra.mxu0 %v416
    %553 = vmatprep.subr.mxu0 0.0
    %554 = vmatpush1.msra.mxu0 %v417
    %555 = vmatprep.subr.mxu0 0.0
    %556 = vmatpush1.msra.mxu0 %v418
    %557 = vmatprep.subr.mxu0 0.0
    %558 = vmatpush1.msra.mxu0 %v419
    %559 = vmatprep.subr.mxu0 0.0
    %560 = vmatpush1.msra.mxu0 %v420
    %561 = vmatprep.subr.mxu0 0.0
    %562 = vmatpush1.msra.mxu0 %v421
    %563 = vmatprep.mubr.f32.mxu0 %v357
    %564 = vmatmul.mubr.f32.gmra.mrb[0].mxu0 %v356
    %v565 = vpop.f32.mrb[0].mxu0
    %v566 = vadd.f32 %v496, %v565
    %v567 = vpop.f32.mrb[0].mxu0
    %568 = vdwg.mxu0
    %v569 = vtanh.pop %v566
    %570 = vst [vmem:[#allocation8] sm:$0xff] %v569
    // Predicated region
    $region34: #{tpu_custom_call.1} parent=1 // pred_check
      _
    $region35: #{tpu_custom_call.1} parent=1 // pred_check_branch
      %572 = sbr.rel (0) target = $region37
    $region36: #{tpu_custom_call.1} parent=1 // pred_region
      %s574 = ssub.s32 128, 128
      %575 = vsyncadd [#allocation4], %s574
      %s577 = sshll.u32 [#allocation8], 4
      %s578 = int_to_ptr.vmem [resolvable:$true] %s577
      %580 = dma.vmem_to_hbm [thread:$0]  %s578, 128, %s5, [#allocation4]
    $region37: #{tpu_custom_call.1} parent=1 // pred_fallthru
      _
    // Predicated region
    $region38: #{tpu_custom_call.1} parent=1 // pred_check
      _
    $region39: #{tpu_custom_call.1} parent=1 // pred_check_branch
      %582 = sbr.rel (0) target = $region41
    $region40: #{tpu_custom_call.1} parent=1 // pred_region
      %583 = dma.done [#allocation4], 128
    $region41: #{tpu_custom_call.1} parent=1 // pred_fallthru
      _
    %584 = vsyncpa [#allocation3], 1
    %585 = vsyncpa [#allocation6], 1
    %586 = vsyncpa [#allocation4], 1

</llo_original>
